<compile_context>
chip_gen: v5e
topology: v5e:2x2
jax: 0.10.0
libtpu: 0.0.40
codegen_flags: <defaults>
</compile_context>

<pallas_src>
import functools

import jax
import jax.numpy as jnp
from jax.experimental import pallas as pl
from jax.experimental.pallas import tpu as pltpu

_LANE = 128     # last-dim (lane) tile
_SUBLANE = 8    # second-to-last (sublane) tile for f32
_MAX_BATCH_TILE = 256   # batch rows per grid step (multiple of 8)


def _round_up(n: int, m: int) -> int:
    return ((n + m - 1) // m) * m


def _pad2d(a, rows, cols):
    """Zero-pad a 2-D array up to (rows, cols); no-op if already that shape."""
    r, c = a.shape
    if r == rows and c == cols:
        return a
    return jnp.pad(a, ((0, rows - r), (0, cols - c)))


def _mlp_fused_kernel(*refs, num_layers: int):
    """Fused forward: h = ReLU(h @ W_i + b_i) for i < L-1, plain last Linear.

    refs = (x_tile, w0, b0, w1, b1, ..., w_{L-1}, b_{L-1}, out_tile).
    x_tile / out_tile are (tile_m, K/N) VMEM blocks of the current grid step;
    weights & biases are whole (padded) arrays resident in VMEM for all steps.
    """
    x_ref = refs[0]
    o_ref = refs[-1]
    wb = refs[1:-1]

    h = x_ref[...]
    for i in range(num_layers):
        w = wb[2 * i][...]
        b = wb[2 * i + 1][...]          # (1, Np) — broadcasts over the batch tile
        h = jnp.dot(h, w, preferred_element_type=jnp.float32) + b
        if i < num_layers - 1:
            h = jnp.maximum(h, 0.0)     # ReLU on the VPU (f32)
    o_ref[...] = h.astype(o_ref.dtype)


def mlp_forward(params, x):
    """Forward pass of the MLP with a single fused Pallas kernel.

    params: list of (w, b) with w shaped (in_features, out_features) — the
            transpose of nn.Linear's (out, in) — and b shaped (out_features,).
    x:      (batch, input_size)
    """
    num_layers = len(params)
    M, K = x.shape
    N = params[-1][0].shape[1]

    # Batch tiling: small batches -> single grid step; large batches -> tiled.
    tile_m = min(_round_up(M, _SUBLANE), _MAX_BATCH_TILE)
    Mp = _round_up(M, tile_m)
    Kp = _round_up(K, _LANE)
    Np = _round_up(N, _LANE)
    grid_m = Mp // tile_m

    x_pad = _pad2d(x, Mp, Kp)

    flat_inputs = [x_pad]
    in_specs = [pl.BlockSpec((tile_m, Kp), lambda i: (i, 0))]
    flops = 0
    bytes_accessed = x_pad.size * x_pad.dtype.itemsize
    for (w, b) in params:
        fi, fo = w.shape
        fip = _round_up(fi, _LANE)
        fop = _round_up(fo, _LANE)
        # Zero padding keeps the math exact: padded activation columns multiply
        # zeroed weight rows; padded output columns get zero bias (and stay
        # zero through ReLU into the next layer).
        w_pad = _pad2d(w, fip, fop)
        b_pad = _pad2d(b.reshape(1, fo), 1, fop)
        flat_inputs += [w_pad, b_pad]
        # Constant block index -> weights/biases stay resident in VMEM across
        # all batch-grid steps (no re-DMA).
        in_specs += [
            pl.BlockSpec((fip, fop), lambda i: (0, 0)),
            pl.BlockSpec((1, fop), lambda i: (0, 0)),
        ]
        flops += 2 * Mp * fip * fop
        bytes_accessed += (w_pad.size + b_pad.size) * w_pad.dtype.itemsize
    bytes_accessed += Mp * Np * x.dtype.itemsize

    kernel = functools.partial(_mlp_fused_kernel, num_layers=num_layers)
    out_pad = pl.pallas_call(
        kernel,
        out_shape=jax.ShapeDtypeStruct((Mp, Np), x.dtype),
        grid=(grid_m,),
        in_specs=in_specs,
        out_specs=pl.BlockSpec((tile_m, Np), lambda i: (i, 0)),
        compiler_params=pltpu.CompilerParams(
            dimension_semantics=("parallel",)),
        cost_estimate=pl.CostEstimate(
            flops=flops, transcendentals=0, bytes_accessed=bytes_accessed),
    )(*flat_inputs)

    if Mp == M and Np == N:
        return out_pad
    return out_pad[:M, :N]


def init_mlp_params(key, input_size, hidden_size, output_size, num_layers,
                    dtype=jnp.float32):
    """Deterministic init. Weights stored as (in_features, out_features)."""
    sizes = [input_size] + [hidden_size] * (num_layers - 1) + [output_size]
    params = []
    for i in range(num_layers):
        fan_in, fan_out = sizes[i], sizes[i + 1]
        key, wk, bk = jax.random.split(key, 3)
        bound = 1.0 / (fan_in ** 0.5)  # matches nn.Linear's uniform bound
        w = jax.random.uniform(wk, (fan_in, fan_out), dtype, -bound, bound)
        b = jax.random.uniform(bk, (fan_out,), dtype, -bound, bound)
        params.append((w, b))
    return params


def mlp_reference(params, x):
    """Pure-JAX reference for correctness checking."""
    n = len(params)
    h = x
    for i, (w, b) in enumerate(params):
        h = h @ w + b
        if i < n - 1:
            h = jnp.maximum(h, 0.0)
    return h


if __name__ == "__main__":
    # MLP(input_size=16, hidden_size=32, output_size=8, num_layers=3)
    #   -> Linear(16,32) + ReLU, Linear(32,32) + ReLU, Linear(32,8)
    input_size, hidden_size, output_size, num_layers = 16, 32, 8, 3
    batch = 2

    key = jax.random.PRNGKey(0)
    pkey, xkey = jax.random.split(key)
    params = init_mlp_params(pkey, input_size, hidden_size, output_size, num_layers)
    x = jax.random.normal(xkey, (batch, input_size), jnp.float32)

    fwd = jax.jit(mlp_forward)
    out = jax.block_until_ready(fwd(params, x))
    ref = jax.block_until_ready(mlp_reference(params, x))

    assert out.shape == (batch, output_size), out.shape
    assert jnp.allclose(out, ref, atol=1e-5, rtol=1e-5), "mismatch vs reference"
    print("KERNEL_OK")
</pallas_src>

<mosaic_0001>
module attributes {stable_mosaic.version = 11 : i64} {
  func.func @_mlp_fused_kernel(%arg0: i32, %arg1: memref<8x128xf32, #tpu.memory_space<vmem>>, %arg2: memref<128x128xf32, #tpu.memory_space<vmem>>, %arg3: memref<1x128xf32, #tpu.memory_space<vmem>>, %arg4: memref<128x128xf32, #tpu.memory_space<vmem>>, %arg5: memref<1x128xf32, #tpu.memory_space<vmem>>, %arg6: memref<128x128xf32, #tpu.memory_space<vmem>>, %arg7: memref<1x128xf32, #tpu.memory_space<vmem>>, %arg8: memref<8x128xf32, #tpu.memory_space<vmem>>) attributes {dimension_semantics = [#tpu.dimension_semantics<parallel>], iteration_bounds = array<i64: 1>, scalar_prefetch = 0 : i64, scratch_operands = 0 : i64, tpu.core_type = #tpu.core_type<tc>, window_params = [{transform_indices = @transform_0, window_bounds = array<i64: 8, 128>}, {pipeline_mode = #tpu.pipeline_mode<synchronous>, transform_indices = @transform_1, window_bounds = array<i64: 128, 128>}, {pipeline_mode = #tpu.pipeline_mode<synchronous>, transform_indices = @transform_2, window_bounds = array<i64: 1, 128>}, {pipeline_mode = #tpu.pipeline_mode<synchronous>, transform_indices = @transform_3, window_bounds = array<i64: 128, 128>}, {pipeline_mode = #tpu.pipeline_mode<synchronous>, transform_indices = @transform_4, window_bounds = array<i64: 1, 128>}, {pipeline_mode = #tpu.pipeline_mode<synchronous>, transform_indices = @transform_5, window_bounds = array<i64: 128, 128>}, {pipeline_mode = #tpu.pipeline_mode<synchronous>, transform_indices = @transform_6, window_bounds = array<i64: 1, 128>}, {transform_indices = @transform_7, window_bounds = array<i64: 8, 128>}]} {
    %c0 = arith.constant 0 : index
    %c0_0 = arith.constant 0 : index
    %0 = vector.load %arg1[%c0, %c0_0] : memref<8x128xf32, #tpu.memory_space<vmem>>, vector<8x128xf32>
    %c0_1 = arith.constant 0 : index
    %c0_2 = arith.constant 0 : index
    %1 = vector.load %arg2[%c0_1, %c0_2] : memref<128x128xf32, #tpu.memory_space<vmem>>, vector<128x128xf32>
    %c0_3 = arith.constant 0 : index
    %c0_4 = arith.constant 0 : index
    %2 = vector.load %arg3[%c0_3, %c0_4] : memref<1x128xf32, #tpu.memory_space<vmem>>, vector<1x128xf32>
    %cst = arith.constant dense<0.000000e+00> : vector<8x128xf32>
    %3 = tpu.matmul %0, %1, %cst {dimension_numbers = #tpu.dot_dimension_numbers<[1], [0], [0], [1], [0, 0, 1, 1], [], []>} : vector<8x128xf32>, vector<128x128xf32>, vector<8x128xf32> -> vector<8x128xf32>
    %4 = vector.broadcast %2 : vector<1x128xf32> to vector<8x128xf32>
    %5 = arith.addf %3, %4 : vector<8x128xf32>
    %cst_5 = arith.constant 0.000000e+00 : f32
    %6 = vector.broadcast %cst_5 : f32 to vector<8x128xf32>
    %7 = arith.maximumf %5, %6 : vector<8x128xf32>
    %c0_6 = arith.constant 0 : index
    %c0_7 = arith.constant 0 : index
    %8 = vector.load %arg4[%c0_6, %c0_7] : memref<128x128xf32, #tpu.memory_space<vmem>>, vector<128x128xf32>
    %c0_8 = arith.constant 0 : index
    %c0_9 = arith.constant 0 : index
    %9 = vector.load %arg5[%c0_8, %c0_9] : memref<1x128xf32, #tpu.memory_space<vmem>>, vector<1x128xf32>
    %cst_10 = arith.constant dense<0.000000e+00> : vector<8x128xf32>
    %10 = tpu.matmul %7, %8, %cst_10 {dimension_numbers = #tpu.dot_dimension_numbers<[1], [0], [0], [1], [0, 0, 1, 1], [], []>} : vector<8x128xf32>, vector<128x128xf32>, vector<8x128xf32> -> vector<8x128xf32>
    %11 = vector.broadcast %9 : vector<1x128xf32> to vector<8x128xf32>
    %12 = arith.addf %10, %11 : vector<8x128xf32>
    %cst_11 = arith.constant 0.000000e+00 : f32
    %13 = vector.broadcast %cst_11 : f32 to vector<8x128xf32>
    %14 = arith.maximumf %12, %13 : vector<8x128xf32>
    %c0_12 = arith.constant 0 : index
    %c0_13 = arith.constant 0 : index
    %15 = vector.load %arg6[%c0_12, %c0_13] : memref<128x128xf32, #tpu.memory_space<vmem>>, vector<128x128xf32>
    %c0_14 = arith.constant 0 : index
    %c0_15 = arith.constant 0 : index
    %16 = vector.load %arg7[%c0_14, %c0_15] : memref<1x128xf32, #tpu.memory_space<vmem>>, vector<1x128xf32>
    %cst_16 = arith.constant dense<0.000000e+00> : vector<8x128xf32>
    %17 = tpu.matmul %14, %15, %cst_16 {dimension_numbers = #tpu.dot_dimension_numbers<[1], [0], [0], [1], [0, 0, 1, 1], [], []>} : vector<8x128xf32>, vector<128x128xf32>, vector<8x128xf32> -> vector<8x128xf32>
    %18 = vector.broadcast %16 : vector<1x128xf32> to vector<8x128xf32>
    %19 = arith.addf %17, %18 : vector<8x128xf32>
    %c0_17 = arith.constant 0 : index
    %c0_18 = arith.constant 0 : index
    %20 = vector.load %arg8[%c0_17, %c0_18] : memref<8x128xf32, #tpu.memory_space<vmem>>, vector<8x128xf32>
    tpu.vector_store %arg8[%c0_17, %c0_18], %19 {strides = array<i32>} : memref<8x128xf32, #tpu.memory_space<vmem>>, vector<8x128xf32>,
    return
  }
  func.func @transform_0(%arg0: i32) -> (i32, i32) {
    %c0_i32 = arith.constant 0 : i32
    %c0_i32_0 = arith.constant 0 : i32
    return %arg0, %c0_i32 : i32, i32
  }
  func.func @transform_1(%arg0: i32) -> (i32, i32) {
    %c0_i32 = arith.constant 0 : i32
    %c0_i32_0 = arith.constant 0 : i32
    %c0_i32_1 = arith.constant 0 : i32
    return %c0_i32, %c0_i32_0 : i32, i32
  }
  func.func @transform_2(%arg0: i32) -> (i32, i32) {
    %c0_i32 = arith.constant 0 : i32
    %c0_i32_0 = arith.constant 0 : i32
    %c0_i32_1 = arith.constant 0 : i32
    return %c0_i32, %c0_i32_0 : i32, i32
  }
  func.func @transform_3(%arg0: i32) -> (i32, i32) {
    %c0_i32 = arith.constant 0 : i32
    %c0_i32_0 = arith.constant 0 : i32
    %c0_i32_1 = arith.constant 0 : i32
    return %c0_i32, %c0_i32_0 : i32, i32
  }
  func.func @transform_4(%arg0: i32) -> (i32, i32) {
    %c0_i32 = arith.constant 0 : i32
    %c0_i32_0 = arith.constant 0 : i32
    %c0_i32_1 = arith.constant 0 : i32
    return %c0_i32, %c0_i32_0 : i32, i32
  }
  func.func @transform_5(%arg0: i32) -> (i32, i32) {
    %c0_i32 = arith.constant 0 : i32
    %c0_i32_0 = arith.constant 0 : i32
    %c0_i32_1 = arith.constant 0 : i32
    return %c0_i32, %c0_i32_0 : i32, i32
  }
  func.func @transform_6(%arg0: i32) -> (i32, i32) {
    %c0_i32 = arith.constant 0 : i32
    %c0_i32_0 = arith.constant 0 : i32
    %c0_i32_1 = arith.constant 0 : i32
    return %c0_i32, %c0_i32_0 : i32, i32
  }
  func.func @transform_7(%arg0: i32) -> (i32, i32) {
    %c0_i32 = arith.constant 0 : i32
    %c0_i32_0 = arith.constant 0 : i32
    return %arg0, %c0_i32 : i32, i32
  }
}

</mosaic_0001>

<llo_original>
// kernel: mlp_forward.1
$region0: #{mlp_forward.1}
  #allocation0 [shape = 'u32[]', space=smem, size = 0x4, offset = 0x4, fixed_abs, tag = 'smem constant byte address 0x4 - core index']
  #allocation1 [shape = 'u32[72,128]{1,0:T(1,128)}', space=vmem, size = 0x9000, scoped, tag = 'internal scratch']
  %s0 = inlined_call_operand.vmem [shape: f32[8,128], index: 0, kind: input, shape index: {}]
  %s1 = inlined_call_operand.vmem [shape: f32[128,128], index: 1, kind: input, shape index: {}]
  %s2 = inlined_call_operand.vmem [shape: f32[1,128], index: 2, kind: input, shape index: {}]
  %s3 = inlined_call_operand.vmem [shape: f32[128,128], index: 3, kind: input, shape index: {}]
  %s4 = inlined_call_operand.vmem [shape: f32[1,128], index: 4, kind: input, shape index: {}]
  %s5 = inlined_call_operand.vmem [shape: f32[128,128], index: 5, kind: input, shape index: {}]
  %s6 = inlined_call_operand.vmem [shape: f32[1,128], index: 6, kind: input, shape index: {}]
  %s7 = inlined_call_operand.vmem [shape: f32[8,128], index: 7, kind: output, shape index: {}]
  %s8 = sld [smem:[#allocation0]]
  $region38: #{mlp_forward.1} parent=0
    _
  %s10 = ssub.s32 1, %s8
  %s11 = scalar_select 0, %s10, %s8
  // Predicated region
  $region2: #{mlp_forward.1} parent=0 // pred_check
    _
  $region3: #{mlp_forward.1} parent=0 // pred_check_branch
    %13 = sbr.rel (0) target = $region5
  $region4: #{mlp_forward.1} parent=0 // pred_region
    _
  $region5: #{mlp_forward.1} parent=0 // pred_fallthru
    _
  // Predicated region
  $region6: #{mlp_forward.1} parent=0 // pred_check
    _
  $region7: #{mlp_forward.1} parent=0 // pred_check_branch
    %15 = sbr.rel (0) target = $region9
  $region8: #{mlp_forward.1} parent=0 // pred_region
    _
  $region9: #{mlp_forward.1} parent=0 // pred_fallthru
    _
  // Predicated region
  $region10: #{mlp_forward.1} parent=0 // pred_check
    _
  $region11: #{mlp_forward.1} parent=0 // pred_check_branch
    %17 = sbr.rel (0) target = $region13
  $region12: #{mlp_forward.1} parent=0 // pred_region
    _
  $region13: #{mlp_forward.1} parent=0 // pred_fallthru
    _
  // Predicated region
  $region14: #{mlp_forward.1} parent=0 // pred_check
    _
  $region15: #{mlp_forward.1} parent=0 // pred_check_branch
    %19 = sbr.rel (0) target = $region17
  $region16: #{mlp_forward.1} parent=0 // pred_region
    _
  $region17: #{mlp_forward.1} parent=0 // pred_fallthru
    _
  // Predicated region
  $region18: #{mlp_forward.1} parent=0 // pred_check
    _
  $region19: #{mlp_forward.1} parent=0 // pred_check_branch
    %21 = sbr.rel (0) target = $region21
  $region20: #{mlp_forward.1} parent=0 // pred_region
    _
  $region21: #{mlp_forward.1} parent=0 // pred_fallthru
    _
  // Predicated region
  $region22: #{mlp_forward.1} parent=0 // pred_check
    _
  $region23: #{mlp_forward.1} parent=0 // pred_check_branch
    %23 = sbr.rel (0) target = $region25
  $region24: #{mlp_forward.1} parent=0 // pred_region
    _
  $region25: #{mlp_forward.1} parent=0 // pred_fallthru
    _
  // Predicated region
  $region26: #{mlp_forward.1} parent=0 // pred_check
    _
  $region27: #{mlp_forward.1} parent=0 // pred_check_branch
    %25 = sbr.rel (0) target = $region29
  $region28: #{mlp_forward.1} parent=0 // pred_region
    _
  $region29: #{mlp_forward.1} parent=0 // pred_fallthru
    _
  %v26 = vld [vmem:[%s0] sm:$0xff]
  %v27 = vld [vmem:[%s1] sm:$0xff]
  %v28 = vld [vmem:[%s1 + $0x8] sm:$0xff]
  %v29 = vld [vmem:[%s1 + $0x10] sm:$0xff]
  %v30 = vld [vmem:[%s1 + $0x18] sm:$0xff]
  %v31 = vld [vmem:[%s1 + $0x20] sm:$0xff]
  %v32 = vld [vmem:[%s1 + $0x28] sm:$0xff]
  %v33 = vld [vmem:[%s1 + $0x30] sm:$0xff]
  %v34 = vld [vmem:[%s1 + $0x38] sm:$0xff]
  %v35 = vld [vmem:[%s1 + $0x40] sm:$0xff]
  %v36 = vld [vmem:[%s1 + $0x48] sm:$0xff]
  %v37 = vld [vmem:[%s1 + $0x50] sm:$0xff]
  %v38 = vld [vmem:[%s1 + $0x58] sm:$0xff]
  %v39 = vld [vmem:[%s1 + $0x60] sm:$0xff]
  %v40 = vld [vmem:[%s1 + $0x68] sm:$0xff]
  %v41 = vld [vmem:[%s1 + $0x70] sm:$0xff]
  %v42 = vld [vmem:[%s1 + $0x78] sm:$0xff]
  %v43 = vld [vmem:[%s2] sm:$0x1]
  %v45 = vperm.slane %v43, 0
  %47 = vmatpush.msra.mxu0 %v42
  %48 = vmatpush.msra.mxu0 %v41
  %49 = vmatpush.msra.mxu0 %v40
  %50 = vmatpush.msra.mxu0 %v39
  %51 = vmatpush.msra.mxu0 %v38
  %52 = vmatpush.msra.mxu0 %v37
  %53 = vmatpush.msra.mxu0 %v36
  %54 = vmatpush.msra.mxu0 %v35
  %55 = vmatpush.msra.mxu0 %v34
  %56 = vmatpush.msra.mxu0 %v33
  %57 = vmatpush.msra.mxu0 %v32
  %58 = vmatpush.msra.mxu0 %v31
  %59 = vmatpush.msra.mxu0 %v30
  %60 = vmatpush.msra.mxu0 %v29
  %61 = vmatpush.msra.mxu0 %v28
  %62 = vmatpush.msra.mxu0 %v27
  %63 = vmatmul.f32.gmra.mxu0 %v26
  %v64 = vpop.f32.mrf.mxu0
  %v65 = vadd.f32 %v45, %v64
  %66 = vdwg.mxu0
  %v67 = vmax.f32 %v65, 0.0
  %v68 = vld [vmem:[%s3] sm:$0xff]
  %v69 = vld [vmem:[%s3 + $0x8] sm:$0xff]
  %v70 = vld [vmem:[%s3 + $0x10] sm:$0xff]
  %v71 = vld [vmem:[%s3 + $0x18] sm:$0xff]
  %v72 = vld [vmem:[%s3 + $0x20] sm:$0xff]
  %v73 = vld [vmem:[%s3 + $0x28] sm:$0xff]
  %v74 = vld [vmem:[%s3 + $0x30] sm:$0xff]
  %v75 = vld [vmem:[%s3 + $0x38] sm:$0xff]
  %v76 = vld [vmem:[%s3 + $0x40] sm:$0xff]
  %v77 = vld [vmem:[%s3 + $0x48] sm:$0xff]
  %v78 = vld [vmem:[%s3 + $0x50] sm:$0xff]
  %v79 = vld [vmem:[%s3 + $0x58] sm:$0xff]
  %v80 = vld [vmem:[%s3 + $0x60] sm:$0xff]
  %v81 = vld [vmem:[%s3 + $0x68] sm:$0xff]
  %v82 = vld [vmem:[%s3 + $0x70] sm:$0xff]
  %v83 = vld [vmem:[%s3 + $0x78] sm:$0xff]
  %v84 = vld [vmem:[%s4] sm:$0x1]
  %v86 = vperm.slane %v84, 0
  %88 = vmatpush.msra.mxu0 %v83
  %89 = vmatpush.msra.mxu0 %v82
  %90 = vmatpush.msra.mxu0 %v81
  %91 = vmatpush.msra.mxu0 %v80
  %92 = vmatpush.msra.mxu0 %v79
  %93 = vmatpush.msra.mxu0 %v78
  %94 = vmatpush.msra.mxu0 %v77
  %95 = vmatpush.msra.mxu0 %v76
  %96 = vmatpush.msra.mxu0 %v75
  %97 = vmatpush.msra.mxu0 %v74
  %98 = vmatpush.msra.mxu0 %v73
  %99 = vmatpush.msra.mxu0 %v72
  %100 = vmatpush.msra.mxu0 %v71
  %101 = vmatpush.msra.mxu0 %v70
  %102 = vmatpush.msra.mxu0 %v69
  %103 = vmatpush.msra.mxu0 %v68
  %104 = vmatmul.f32.gmra.mxu0 %v67
  %v105 = vpop.f32.mrf.mxu0
  %v106 = vadd.f32 %v86, %v105
  %107 = vdwg.mxu0
  %v108 = vmax.f32 %v106, 0.0
  %v109 = vld [vmem:[%s5] sm:$0xff]
  %v110 = vld [vmem:[%s5 + $0x8] sm:$0xff]
  %v111 = vld [vmem:[%s5 + $0x10] sm:$0xff]
  %v112 = vld [vmem:[%s5 + $0x18] sm:$0xff]
  %v113 = vld [vmem:[%s5 + $0x20] sm:$0xff]
  %v114 = vld [vmem:[%s5 + $0x28] sm:$0xff]
  %v115 = vld [vmem:[%s5 + $0x30] sm:$0xff]
  %v116 = vld [vmem:[%s5 + $0x38] sm:$0xff]
  %v117 = vld [vmem:[%s5 + $0x40] sm:$0xff]
  %v118 = vld [vmem:[%s5 + $0x48] sm:$0xff]
  %v119 = vld [vmem:[%s5 + $0x50] sm:$0xff]
  %v120 = vld [vmem:[%s5 + $0x58] sm:$0xff]
  %v121 = vld [vmem:[%s5 + $0x60] sm:$0xff]
  %v122 = vld [vmem:[%s5 + $0x68] sm:$0xff]
  %v123 = vld [vmem:[%s5 + $0x70] sm:$0xff]
  %v124 = vld [vmem:[%s5 + $0x78] sm:$0xff]
  %v125 = vld [vmem:[%s6] sm:$0x1]
  %v127 = vperm.slane %v125, 0
  %129 = vmatpush.msra.mxu0 %v124
  %130 = vmatpush.msra.mxu0 %v123
  %131 = vmatpush.msra.mxu0 %v122
  %132 = vmatpush.msra.mxu0 %v121
  %133 = vmatpush.msra.mxu0 %v120
  %134 = vmatpush.msra.mxu0 %v119
  %135 = vmatpush.msra.mxu0 %v118
  %136 = vmatpush.msra.mxu0 %v117
  %137 = vmatpush.msra.mxu0 %v116
  %138 = vmatpush.msra.mxu0 %v115
  %139 = vmatpush.msra.mxu0 %v114
  %140 = vmatpush.msra.mxu0 %v113
  %141 = vmatpush.msra.mxu0 %v112
  %142 = vmatpush.msra.mxu0 %v111
  %143 = vmatpush.msra.mxu0 %v110
  %144 = vmatpush.msra.mxu0 %v109
  %145 = vmatmul.f32.gmra.mxu0 %v108
  %v146 = vpop.f32.mrf.mxu0
  %v147 = vadd.f32 %v127, %v146
  %148 = vdwg.mxu0
  %149 = vst [vmem:[%s7] sm:$0xff] %v147
  // Predicated region
  $region30: #{mlp_forward.1} parent=0 // pred_check
    _
  $region31: #{mlp_forward.1} parent=0 // pred_check_branch
    %151 = sbr.rel (0) target = $region33
  $region32: #{mlp_forward.1} parent=0 // pred_region
    _
  $region33: #{mlp_forward.1} parent=0 // pred_fallthru
    _
  // Predicated region
  $region34: #{mlp_forward.1} parent=0 // pred_check
    _
  $region35: #{mlp_forward.1} parent=0 // pred_check_branch
    %153 = sbr.rel (0) target = $region37
  $region36: #{mlp_forward.1} parent=0 // pred_region
    _
  $region37: #{mlp_forward.1} parent=0 // pred_fallthru
    _

</llo_original>
